<compile_context>
chip_gen: v7x
topology: tpu7x:2x2x1
jax: 0.10.0
libtpu: 0.0.40
codegen_flags: <defaults>
</compile_context>

<pallas_src>
import jax
import jax.numpy as jnp
from jax import lax
from jax.experimental import pallas as pl
from jax.experimental.pallas import tpu as pltpu


def _round_up(a: int, b: int) -> int:
    return (a + b - 1) // b * b


# --------------------------------------------------------------------------
# Kernel
# --------------------------------------------------------------------------
def _ff_kernel(x_ref, w1_ref, w2_ref, o_ref, acc_ref):
    # x_ref  : (TM, D)      activation tile, original dtype (cast in-kernel)
    # w1_ref : (2, TN, D)   [proj; gate] fc1 rows for hidden chunk j
    # w2_ref : (D, TN)      fc2 columns for hidden chunk j
    # o_ref  : (TM, D)      output tile (written on the last hidden chunk only)
    # acc_ref: (TM, D) f32  accumulator across hidden chunks
    j = pl.program_id(1)
    tn = w1_ref.shape[1]
    d = w1_ref.shape[2]

    nt = (((1,), (1,)), ((), ()))            # A @ B^T: contract lane axis of B
    x = x_ref[...].astype(w1_ref.dtype)      # cast to compute dtype in-kernel

    # Fused fc1: one MXU pass computes proj and gate together.  The
    # (2, tn, d) -> (2*tn, d) merge is a contiguous leading-dim reshape
    # (tn is a multiple of 128), i.e. layout-free.
    w1 = w1_ref[...].reshape(2 * tn, d)
    pg = lax.dot_general(x, w1, nt, preferred_element_type=jnp.float32)
    proj = pg[:, :tn]
    gate = pg[:, tn:]

    # SiLU(proj) * gate in f32 (VPU/EUP; v5e has no bf16 VPU/EUP).
    h = proj * jax.nn.sigmoid(proj) * gate

    # fc2 partial product for this hidden chunk (f32 accumulation).
    partial = lax.dot_general(h.astype(w2_ref.dtype), w2_ref[...], nt,
                              preferred_element_type=jnp.float32)

    @pl.when(j == 0)
    def _first():                            # skip zero-init + add on chunk 0
        acc_ref[...] = partial

    @pl.when(j > 0)
    def _accumulate():
        acc_ref[...] += partial

    @pl.when(j == pl.num_programs(1) - 1)
    def _finalize():
        o_ref[...] = acc_ref[...].astype(o_ref.dtype)


# --------------------------------------------------------------------------
# Tile selection (VMEM-budget aware, generation aware)
# --------------------------------------------------------------------------
def _vmem_block_bytes(tm, tn, d_p, x_dtype, out_dtype, compute_dtype):
    xi = jnp.dtype(x_dtype).itemsize
    oi = jnp.dtype(out_dtype).itemsize
    ci = jnp.dtype(compute_dtype).itemsize
    x_blk = tm * d_p * xi
    w1_blk = 2 * tn * d_p * ci
    w2_blk = d_p * tn * ci
    o_blk = tm * d_p * oi
    acc = tm * d_p * 4
    # inputs and outputs are double-buffered by the BlockSpec pipeline
    return 2 * (x_blk + w1_blk + w2_blk + o_blk) + acc


def _divisor_tile(h_p, desired):
    """Largest multiple of 128 that divides h_p and is <= desired (>= 128)."""
    desired = max(128, int(desired))
    best = 128
    t = 256
    while t <= min(h_p, desired):
        if h_p % t == 0:
            best = t
        t += 128
    return best


def _select_tiles(m, h_p, d_p, x_dtype, out_dtype, compute_dtype,
                  tile_m=None, tile_h=None):
    try:
        vmem_cap = int(pltpu.get_tpu_info().vmem_capacity_bytes)
    except Exception:
        vmem_cap = 64 << 20                 # conservative: v7x per-TC VMEM
    budget = int(vmem_cap * 0.85)

    m8 = _round_up(max(m, 1), 8)
    want_tm = _round_up(tile_m, 8) if tile_m else 512
    tm = min(want_tm, m8)
    tn = _divisor_tile(h_p, tile_h if tile_h else 512)

    def fits(a, b):
        return _vmem_block_bytes(a, b, d_p, x_dtype, out_dtype,
                                 compute_dtype) <= budget

    # Shrink the hidden chunk first (keeps tm — and hence arithmetic
    # intensity — large), then the token tile.
    while not fits(tm, tn) and tn > 128:
        new_tn = _divisor_tile(h_p, tn // 2)
        if new_tn >= tn:
            break
        tn = new_tn
    while not fits(tm, tn) and tm > 8:
        tm = max(8, _round_up(tm // 2, 8))

    # Balanced M tiling: minimize zero-row padding; prefer an even M-tile
    # count (v7x megacore balance) when tiles stay comfortably compute-bound.
    if m8 <= tm:
        tm, m_tiles = m8, 1
    else:
        m_tiles = -(-m // tm)
        if m_tiles > 1 and m_tiles % 2 == 1:
            even_tm = _round_up(-(-m // (m_tiles + 1)), 8)
            if even_tm >= 256:
                m_tiles += 1
        tm = _round_up(-(-m // m_tiles), 8)

    needed = _vmem_block_bytes(tm, tn, d_p, x_dtype, out_dtype, compute_dtype)
    vmem_limit = int(min(vmem_cap * 0.9, max(32 << 20, needed + (4 << 20))))
    return tm, tn, m_tiles, vmem_limit


# --------------------------------------------------------------------------
# Weight preparation (hoisted out of the per-call hot path)
# --------------------------------------------------------------------------
def prepare_ffn_weights(w1, w2, *, compute_dtype=jnp.bfloat16):
    """Pad + cast PyTorch-layout weights once, at parameter-prep time.

    w1: (2*hidden, dim)  fc1.weight; rows [0:hidden]=proj, [hidden:]=gate.
    w2: (dim, hidden)    fc2.weight.
    Returns (w1r, w2p, dim, hidden) with w1r:(2,h_p,d_p), w2p:(d_p,h_p).
    """
    two_hidden, dim = w1.shape
    hidden = two_hidden // 2
    assert two_hidden == 2 * hidden and w2.shape == (dim, hidden)
    d_p = _round_up(dim, 128)
    h_p = _round_up(hidden, 128)

    w1r = w1.reshape(2, hidden, dim)
    if (h_p, d_p) != (hidden, dim):
        w1r = jnp.pad(w1r, ((0, 0), (0, h_p - hidden), (0, d_p - dim)))
    w1r = w1r.astype(compute_dtype)

    w2p = w2
    if (d_p, h_p) != (dim, hidden):
        w2p = jnp.pad(w2p, ((0, d_p - dim), (0, h_p - hidden)))
    w2p = w2p.astype(compute_dtype)
    return w1r, w2p, dim, hidden


# --------------------------------------------------------------------------
# Forward pass
# --------------------------------------------------------------------------
def feed_forward_prepared(x, prepared, *, tile_m=None, tile_h=None):
    w1r, w2p, dim, hidden = prepared
    compute_dtype = w1r.dtype
    orig_shape = x.shape
    out_dtype = x.dtype
    assert orig_shape[-1] == dim

    _, h_p, d_p = w1r.shape
    x2d = x.reshape(-1, dim)
    m = x2d.shape[0]

    tm, tn, m_tiles, vmem_limit = _select_tiles(
        m, h_p, d_p, x.dtype, out_dtype, compute_dtype,
        tile_m=tile_m, tile_h=tile_h)
    m_p = tm * m_tiles

    if (m_p, d_p) != (m, dim):               # pad only; no dtype cast here
        x2d = jnp.pad(x2d, ((0, m_p - m), (0, d_p - dim)))

    grid = (m_tiles, h_p // tn)

    # Advisory cost: weights are re-streamed once per M tile.
    ci = jnp.dtype(compute_dtype).itemsize
    flops = 6 * m_p * h_p * d_p              # fc1 (proj+gate) + fc2
    bytes_accessed = (m_p * d_p * jnp.dtype(x.dtype).itemsize
                      + grid[0] * 3 * h_p * d_p * ci
                      + m_p * d_p * jnp.dtype(out_dtype).itemsize)
    cost = pl.CostEstimate(flops=flops, transcendentals=m_p * h_p,
                           bytes_accessed=bytes_accessed)

    out = pl.pallas_call(
        _ff_kernel,
        out_shape=jax.ShapeDtypeStruct((m_p, d_p), out_dtype),
        grid_spec=pltpu.PrefetchScalarGridSpec(
            num_scalar_prefetch=0,
            grid=grid,
            in_specs=[
                pl.BlockSpec((tm, d_p), lambda i, j: (i, 0)),        # x tile
                pl.BlockSpec((2, tn, d_p), lambda i, j: (0, j, 0)),  # fc1 chunk
                pl.BlockSpec((d_p, tn), lambda i, j: (0, j)),        # fc2 chunk
            ],
            out_specs=pl.BlockSpec((tm, d_p), lambda i, j: (i, 0)),
            scratch_shapes=[pltpu.VMEM((tm, d_p), jnp.float32)],
        ),
        compiler_params=pltpu.CompilerParams(
            dimension_semantics=("parallel", "arbitrary"),
            vmem_limit_bytes=vmem_limit,
        ),
        cost_estimate=cost,
    )(x2d, w1r, w2p)

    return out[:m, :dim].reshape(orig_shape)


def feed_forward(x, w1, w2, *, tile_m=None, tile_h=None,
                 compute_dtype=jnp.bfloat16):
    """Convenience wrapper (prepares weights per call; prefer preparing once)."""
    return feed_forward_prepared(
        x, prepare_ffn_weights(w1, w2, compute_dtype=compute_dtype),
        tile_m=tile_m, tile_h=tile_h)


def _reference(x, w1, w2):
    hidden = w2.shape[1]
    h = x @ w1.T
    proj, gate = h[..., :hidden], h[..., hidden:]
    return (proj * jax.nn.sigmoid(proj) * gate) @ w2.T


if __name__ == "__main__":
    key = jax.random.PRNGKey(0)
    batch, seq, dim, hidden = 2, 7, 128, 384

    kx, k1, k2 = jax.random.split(key, 3)
    x = jax.random.normal(kx, (batch, seq, dim), dtype=jnp.float32)
    w1 = jax.random.uniform(
        k1, (2 * hidden, dim), dtype=jnp.float32,
        minval=-1.0 / dim ** 0.5, maxval=1.0 / dim ** 0.5)
    w2 = jax.random.uniform(
        k2, (dim, hidden), dtype=jnp.float32,
        minval=-1.0 / hidden ** 0.5, maxval=1.0 / hidden ** 0.5)

    ref = _reference(x, w1, w2)

    # Weight prep hoisted out of the per-call path (pad + bf16 cast once).
    prepared = prepare_ffn_weights(w1, w2)

    # Auto tiles: single tile per axis at these toy shapes.
    out_a = jax.block_until_ready(feed_forward_prepared(x, prepared))
    # Forced small tiles: exercises M tiling (2 parallel M tiles) and the
    # hidden-chunk accumulation path (3 chunks).
    out_b = jax.block_until_ready(
        feed_forward_prepared(x, prepared, tile_m=8, tile_h=128))
    # Convenience path (per-call weight prep).
    out_c = jax.block_until_ready(feed_forward(x, w1, w2))

    # bf16 matmul operands (f32 accumulation) -> loosened tolerance vs f32 ref.
    for out in (out_a, out_b, out_c):
        assert out.shape == (batch, seq, dim)
        err = float(jnp.max(jnp.abs(out - ref)))
        assert jnp.allclose(out, ref, atol=5e-2, rtol=5e-2), err

    print("KERNEL_OK")
</pallas_src>

<mosaic_0001>
module attributes {stable_mosaic.version = 11 : i64} {
  func.func @_ff_kernel(%arg0: i32, %arg1: i32, %arg2: memref<16x128xf32, #tpu.memory_space<vmem>>, %arg3: memref<2x384x128xbf16, #tpu.memory_space<vmem>>, %arg4: memref<128x384xbf16, #tpu.memory_space<vmem>>, %arg5: memref<16x128xf32, #tpu.memory_space<vmem>>, %arg6: memref<16x128xf32, #tpu.memory_space<vmem>>) attributes {dimension_semantics = [#tpu.dimension_semantics<parallel>, #tpu.dimension_semantics<arbitrary>], iteration_bounds = array<i64: 1, 1>, scalar_prefetch = 0 : i64, scratch_operands = 1 : i64, tpu.core_type = #tpu.core_type<tc>, window_params = [{transform_indices = @transform_0, window_bounds = array<i64: 16, 128>}, {transform_indices = @transform_1, window_bounds = array<i64: 2, 384, 128>}, {transform_indices = @transform_2, window_bounds = array<i64: 128, 384>}, {transform_indices = @transform_3, window_bounds = array<i64: 16, 128>}]} {
    %c0 = arith.constant 0 : index
    %c0_0 = arith.constant 0 : index
    %0 = vector.load %arg2[%c0, %c0_0] : memref<16x128xf32, #tpu.memory_space<vmem>>, vector<16x128xf32>
    %1 = arith.truncf %0 : vector<16x128xf32> to vector<16x128xbf16>
    %c0_1 = arith.constant 0 : index
    %c0_2 = arith.constant 0 : index
    %c0_3 = arith.constant 0 : index
    %2 = vector.load %arg3[%c0_1, %c0_2, %c0_3] : memref<2x384x128xbf16, #tpu.memory_space<vmem>>, vector<2x384x128xbf16>
    %3 = vector.shape_cast %2 : vector<2x384x128xbf16> to vector<768x128xbf16>
    %cst = arith.constant dense<0.000000e+00> : vector<16x768xf32>
    %4 = tpu.matmul %1, %3, %cst {dimension_numbers = #tpu.dot_dimension_numbers<[1], [1], [0], [0], [0, 0, 1, 0], [], []>} : vector<16x128xbf16>, vector<768x128xbf16>, vector<16x768xf32> -> vector<16x768xf32>
    %5 = vector.extract_strided_slice %4 {offsets = [0, 0], sizes = [16, 384], strides = [1, 1]} : vector<16x768xf32> to vector<16x384xf32>
    %6 = vector.extract_strided_slice %4 {offsets = [0, 384], sizes = [16, 384], strides = [1, 1]} : vector<16x768xf32> to vector<16x384xf32>
    %7 = arith.negf %5 : vector<16x384xf32>
    %8 = math.exp %7 : vector<16x384xf32>
    %cst_4 = arith.constant 1.000000e+00 : f32
    %9 = vector.broadcast %cst_4 : f32 to vector<16x384xf32>
    %10 = arith.addf %9, %8 : vector<16x384xf32>
    %11 = arith.divf %9, %10 : vector<16x384xf32>
    %12 = arith.mulf %5, %11 : vector<16x384xf32>
    %13 = arith.mulf %12, %6 : vector<16x384xf32>
    %14 = arith.truncf %13 : vector<16x384xf32> to vector<16x384xbf16>
    %c0_5 = arith.constant 0 : index
    %c0_6 = arith.constant 0 : index
    %15 = vector.load %arg4[%c0_5, %c0_6] : memref<128x384xbf16, #tpu.memory_space<vmem>>, vector<128x384xbf16>
    %cst_7 = arith.constant dense<0.000000e+00> : vector<16x128xf32>
    %16 = tpu.matmul %14, %15, %cst_7 {dimension_numbers = #tpu.dot_dimension_numbers<[1], [1], [0], [0], [0, 0, 1, 0], [], []>} : vector<16x384xbf16>, vector<128x384xbf16>, vector<16x128xf32> -> vector<16x128xf32>
    %c0_i32 = arith.constant 0 : i32
    %17 = arith.cmpi eq, %arg1, %c0_i32 : i32
    %18 = arith.extui %17 : i1 to i32
    %c0_i32_8 = arith.constant 0 : i32
    %19 = arith.cmpi ne, %18, %c0_i32_8 : i32
    scf.if %19 {
      %c0_13 = arith.constant 0 : index
      %c0_14 = arith.constant 0 : index
      %26 = vector.load %arg6[%c0_13, %c0_14] : memref<16x128xf32, #tpu.memory_space<vmem>>, vector<16x128xf32>
      tpu.vector_store %arg6[%c0_13, %c0_14], %16 {strides = array<i32>} : memref<16x128xf32, #tpu.memory_space<vmem>>, vector<16x128xf32>,
    } else {
    }
    %c0_i32_9 = arith.constant 0 : i32
    %20 = arith.cmpi sgt, %arg1, %c0_i32_9 : i32
    %21 = arith.extui %20 : i1 to i32
    %c0_i32_10 = arith.constant 0 : i32
    %22 = arith.cmpi ne, %21, %c0_i32_10 : i32
    scf.if %22 {
      %c0_13 = arith.constant 0 : index
      %c0_14 = arith.constant 0 : index
      %26 = vector.load %arg6[%c0_13, %c0_14] : memref<16x128xf32, #tpu.memory_space<vmem>>, vector<16x128xf32>
      %27 = arith.addf %26, %16 : vector<16x128xf32>
      %c0_15 = arith.constant 0 : index
      %c0_16 = arith.constant 0 : index
      %28 = vector.load %arg6[%c0_15, %c0_16] : memref<16x128xf32, #tpu.memory_space<vmem>>, vector<16x128xf32>
      tpu.vector_store %arg6[%c0_15, %c0_16], %27 {strides = array<i32>} : memref<16x128xf32, #tpu.memory_space<vmem>>, vector<16x128xf32>,
    } else {
    }
    %c0_i32_11 = arith.constant 0 : i32
    %23 = arith.cmpi eq, %arg1, %c0_i32_11 : i32
    %24 = arith.extui %23 : i1 to i32
    %c0_i32_12 = arith.constant 0 : i32
    %25 = arith.cmpi ne, %24, %c0_i32_12 : i32
    scf.if %25 {
      %c0_13 = arith.constant 0 : index
      %c0_14 = arith.constant 0 : index
      %26 = vector.load %arg6[%c0_13, %c0_14] : memref<16x128xf32, #tpu.memory_space<vmem>>, vector<16x128xf32>
      %c0_15 = arith.constant 0 : index
      %c0_16 = arith.constant 0 : index
      %27 = vector.load %arg5[%c0_15, %c0_16] : memref<16x128xf32, #tpu.memory_space<vmem>>, vector<16x128xf32>
      tpu.vector_store %arg5[%c0_15, %c0_16], %26 {strides = array<i32>} : memref<16x128xf32, #tpu.memory_space<vmem>>, vector<16x128xf32>,
    } else {
    }
    return
  }
  func.func @transform_0(%arg0: i32, %arg1: i32) -> (i32, i32) {
    %c0_i32 = arith.constant 0 : i32
    %c0_i32_0 = arith.constant 0 : i32
    return %arg0, %c0_i32 : i32, i32
  }
  func.func @transform_1(%arg0: i32, %arg1: i32) -> (i32, i32, i32) {
    %c0_i32 = arith.constant 0 : i32
    %c0_i32_0 = arith.constant 0 : i32
    %c0_i32_1 = arith.constant 0 : i32
    return %c0_i32, %arg1, %c0_i32_0 : i32, i32, i32
  }
  func.func @transform_2(%arg0: i32, %arg1: i32) -> (i32, i32) {
    %c0_i32 = arith.constant 0 : i32
    %c0_i32_0 = arith.constant 0 : i32
    return %c0_i32, %arg1 : i32, i32
  }
  func.func @transform_3(%arg0: i32, %arg1: i32) -> (i32, i32) {
    %c0_i32 = arith.constant 0 : i32
    %c0_i32_0 = arith.constant 0 : i32
    return %arg0, %c0_i32 : i32, i32
  }
}

</mosaic_0001>

<llo_original>
// kernel: tpu_custom_call.1
$region0: #{tpu_custom_call.1}
  #allocation0 [shape = 'u32[]', space=smem, size = 0x4, offset = 0x4, fixed_abs, tag = 'smem constant byte address 0x4 - core index']
  #allocation1 [shape = 'u32[144,128]{1,0:T(1,128)}', space=vmem, size = 0x12000, scoped, tag = 'internal scratch']
  #allocation2 [shape = 'f32[16,128]{1,0:T(8,128)}', space=vmem, size = 0x2000, scoped, tag = 'scratch operand']
  %s0 = inlined_call_operand.hbm [shape: f32[16,128], index: 0, kind: input, shape index: {}]
  %s1 = inlined_call_operand.hbm [shape: bf16[2,384,128], index: 1, kind: input, shape index: {}]
  %s2 = inlined_call_operand.hbm [shape: bf16[128,384], index: 2, kind: input, shape index: {}]
  %s3 = inlined_call_operand.hbm [shape: f32[16,128], index: 3, kind: output, shape index: {}]
  %s4 = sld [smem:[#allocation0]]
  $region46: #{tpu_custom_call.1} parent=0
    _
  %s6 = ssub.s32 1, %s4
  %s7 = scalar_select 0, %s6, %s4
  $region1: #{tpu_custom_call.1} parent=0
    #allocation3 [shape = 'u8[8192]{0}', space=vmem, size = 0x2000, scoped, tag = 'input window, operand 0, single buffered']
    #allocation4 [shape = 's32[1]{0}', space=sflag, size = 0x4, scoped, tag = 'scoped memory for tpu_custom_call.1']
    #allocation5 [shape = 's32[1]{0}', space=sflag, size = 0x4, scoped, tag = 'scoped memory for tpu_custom_call.1']
    #allocation6 [shape = 'u8[196608]{0}', space=vmem, size = 0x30000, scoped, tag = 'input window, operand 1, single buffered']
    #allocation7 [shape = 's32[1]{0}', space=sflag, size = 0x4, scoped, tag = 'scoped memory for tpu_custom_call.1']
    #allocation8 [shape = 'u8[98304]{0}', space=vmem, size = 0x18000, scoped, tag = 'input window, operand 2, single buffered']
    #allocation9 [shape = 'u8[8192]{0}', space=vmem, size = 0x2000, scoped, tag = 'output window, operand 0, single buffered']
    %8 = vsyncpa [#allocation4], 0
    %9 = vsyncpa [#allocation7], 0
    %10 = vsyncpa [#allocation5], 0
    // Predicated region
    $region2: #{tpu_custom_call.1} parent=1 // pred_check
      _
    $region3: #{tpu_custom_call.1} parent=1 // pred_check_branch
      %12 = sbr.rel (0) target = $region5
    $region4: #{tpu_custom_call.1} parent=1 // pred_region
      %s14 = ssub.s32 256, 256
      %15 = vsyncadd [#allocation4], %s14
      %s16 = sshll.u32 [#allocation3], 4
      %s17 = int_to_ptr.vmem [resolvable:$true] %s16
      %22 = dma.hbm_to_vmem [thread:$0]  %s0, 256, %s17, [#allocation4], 128, 128, 8
    $region5: #{tpu_custom_call.1} parent=1 // pred_fallthru
      _
    // Predicated region
    $region6: #{tpu_custom_call.1} parent=1 // pred_check
      _
    $region7: #{tpu_custom_call.1} parent=1 // pred_check_branch
      %24 = sbr.rel (0) target = $region9
    $region8: #{tpu_custom_call.1} parent=1 // pred_region
      %s26 = ssub.s32 6144, 6144
      %27 = vsyncadd [#allocation7], %s26
      %s28 = sshll.u32 [#allocation6], 4
      %s29 = int_to_ptr.vmem [resolvable:$true] %s28
      %34 = dma.hbm_to_vmem [thread:$0]  %s1, 6144, %s29, [#allocation7], 64, 64, 4
    $region9: #{tpu_custom_call.1} parent=1 // pred_fallthru
      _
    // Predicated region
    $region10: #{tpu_custom_call.1} parent=1 // pred_check
      _
    $region11: #{tpu_custom_call.1} parent=1 // pred_check_branch
      %36 = sbr.rel (0) target = $region13
    $region12: #{tpu_custom_call.1} parent=1 // pred_region
      %s38 = ssub.s32 3072, 3072
      %39 = vsyncadd [#allocation7], %s38
      %s40 = sshll.u32 [#allocation8], 4
      %s41 = int_to_ptr.vmem [resolvable:$true] %s40
      %46 = dma.hbm_to_vmem [thread:$0]  %s2, 3072, %s41, [#allocation7], 192, 192, 12
    $region13: #{tpu_custom_call.1} parent=1 // pred_fallthru
      _
    // Predicated region
    $region14: #{tpu_custom_call.1} parent=1 // pred_check
      _
    $region15: #{tpu_custom_call.1} parent=1 // pred_check_branch
      %48 = sbr.rel (0) target = $region17
    $region16: #{tpu_custom_call.1} parent=1 // pred_region
      %49 = dma.done [#allocation4], 256
    $region17: #{tpu_custom_call.1} parent=1 // pred_fallthru
      _
    // Predicated region
    $region18: #{tpu_custom_call.1} parent=1 // pred_check
      _
    $region19: #{tpu_custom_call.1} parent=1 // pred_check_branch
      %51 = sbr.rel (0) target = $region21
    $region20: #{tpu_custom_call.1} parent=1 // pred_region
      %52 = dma.done [#allocation7], 6144
    $region21: #{tpu_custom_call.1} parent=1 // pred_fallthru
      _
    // Predicated region
    $region22: #{tpu_custom_call.1} parent=1 // pred_check
      _
    $region23: #{tpu_custom_call.1} parent=1 // pred_check_branch
      %54 = sbr.rel (0) target = $region25
    $region24: #{tpu_custom_call.1} parent=1 // pred_region
      %55 = dma.done [#allocation7], 3072
    $region25: #{tpu_custom_call.1} parent=1 // pred_fallthru
      _
    %v57 = vld [vmem:[#allocation3] sm:$0xff]
    %v58 = vld [vmem:[#allocation3 + $0x8] sm:$0xff]
    %v59 = vpack.c.bf16 %v58, %v57
    %v60 = vld [vmem:[#allocation6] sm:$0xf]
    %v61 = vld [vmem:[#allocation6 + $0x4] sm:$0xf]
    %v62 = vld [vmem:[#allocation6 + $0x8] sm:$0xf]
    %v63 = vld [vmem:[#allocation6 + $0xc] sm:$0xf]
    %v64 = vld [vmem:[#allocation6 + $0x10] sm:$0xf]
    %v65 = vld [vmem:[#allocation6 + $0x14] sm:$0xf]
    %v66 = vld [vmem:[#allocation6 + $0x18] sm:$0xf]
    %v67 = vld [vmem:[#allocation6 + $0x1c] sm:$0xf]
    %v68 = vld [vmem:[#allocation6 + $0x20] sm:$0xf]
    %v69 = vld [vmem:[#allocation6 + $0x24] sm:$0xf]
    %v70 = vld [vmem:[#allocation6 + $0x28] sm:$0xf]
    %v71 = vld [vmem:[#allocation6 + $0x2c] sm:$0xf]
    %v72 = vld [vmem:[#allocation6 + $0x30] sm:$0xf]
    %v73 = vld [vmem:[#allocation6 + $0x34] sm:$0xf]
    %v74 = vld [vmem:[#allocation6 + $0x38] sm:$0xf]
    %v75 = vld [vmem:[#allocation6 + $0x3c] sm:$0xf]
    %v76 = vld [vmem:[#allocation6 + $0x40] sm:$0xf]
    %v77 = vld [vmem:[#allocation6 + $0x44] sm:$0xf]
    %v78 = vld [vmem:[#allocation6 + $0x48] sm:$0xf]
    %v79 = vld [vmem:[#allocation6 + $0x4c] sm:$0xf]
    %v80 = vld [vmem:[#allocation6 + $0x50] sm:$0xf]
    %v81 = vld [vmem:[#allocation6 + $0x54] sm:$0xf]
    %v82 = vld [vmem:[#allocation6 + $0x58] sm:$0xf]
    %v83 = vld [vmem:[#allocation6 + $0x5c] sm:$0xf]
    %v84 = vld [vmem:[#allocation6 + $0x60] sm:$0xf]
    %v85 = vld [vmem:[#allocation6 + $0x64] sm:$0xf]
    %v86 = vld [vmem:[#allocation6 + $0x68] sm:$0xf]
    %v87 = vld [vmem:[#allocation6 + $0x6c] sm:$0xf]
    %v88 = vld [vmem:[#allocation6 + $0x70] sm:$0xf]
    %v89 = vld [vmem:[#allocation6 + $0x74] sm:$0xf]
    %v90 = vld [vmem:[#allocation6 + $0x78] sm:$0xf]
    %v91 = vld [vmem:[#allocation6 + $0x7c] sm:$0xf]
    %v92 = vld [vmem:[#allocation6 + $0x80] sm:$0xf]
    %v93 = vld [vmem:[#allocation6 + $0x84] sm:$0xf]
    %v94 = vld [vmem:[#allocation6 + $0x88] sm:$0xf]
    %v95 = vld [vmem:[#allocation6 + $0x8c] sm:$0xf]
    %v96 = vld [vmem:[#allocation6 + $0x90] sm:$0xf]
    %v97 = vld [vmem:[#allocation6 + $0x94] sm:$0xf]
    %v98 = vld [vmem:[#allocation6 + $0x98] sm:$0xf]
    %v99 = vld [vmem:[#allocation6 + $0x9c] sm:$0xf]
    %v100 = vld [vmem:[#allocation6 + $0xa0] sm:$0xf]
    %v101 = vld [vmem:[#allocation6 + $0xa4] sm:$0xf]
    %v102 = vld [vmem:[#allocation6 + $0xa8] sm:$0xf]
    %v103 = vld [vmem:[#allocation6 + $0xac] sm:$0xf]
    %v104 = vld [vmem:[#allocation6 + $0xb0] sm:$0xf]
    %v105 = vld [vmem:[#allocation6 + $0xb4] sm:$0xf]
    %v106 = vld [vmem:[#allocation6 + $0xb8] sm:$0xf]
    %v107 = vld [vmem:[#allocation6 + $0xbc] sm:$0xf]
    %v108 = vld [vmem:[#allocation6 + $0xc0] sm:$0xf]
    %v109 = vld [vmem:[#allocation6 + $0xc4] sm:$0xf]
    %v110 = vld [vmem:[#allocation6 + $0xc8] sm:$0xf]
    %v111 = vld [vmem:[#allocation6 + $0xcc] sm:$0xf]
    %v112 = vld [vmem:[#allocation6 + $0xd0] sm:$0xf]
    %v113 = vld [vmem:[#allocation6 + $0xd4] sm:$0xf]
    %v114 = vld [vmem:[#allocation6 + $0xd8] sm:$0xf]
    %v115 = vld [vmem:[#allocation6 + $0xdc] sm:$0xf]
    %v116 = vld [vmem:[#allocation6 + $0xe0] sm:$0xf]
    %v117 = vld [vmem:[#allocation6 + $0xe4] sm:$0xf]
    %v118 = vld [vmem:[#allocation6 + $0xe8] sm:$0xf]
    %v119 = vld [vmem:[#allocation6 + $0xec] sm:$0xf]
    %v120 = vld [vmem:[#allocation6 + $0xf0] sm:$0xf]
    %v121 = vld [vmem:[#allocation6 + $0xf4] sm:$0xf]
    %v122 = vld [vmem:[#allocation6 + $0xf8] sm:$0xf]
    %v123 = vld [vmem:[#allocation6 + $0xfc] sm:$0xf]
    %v124 = vld [vmem:[#allocation6 + $0x100] sm:$0xf]
    %v125 = vld [vmem:[#allocation6 + $0x104] sm:$0xf]
    %v126 = vld [vmem:[#allocation6 + $0x108] sm:$0xf]
    %v127 = vld [vmem:[#allocation6 + $0x10c] sm:$0xf]
    %v128 = vld [vmem:[#allocation6 + $0x110] sm:$0xf]
    %v129 = vld [vmem:[#allocation6 + $0x114] sm:$0xf]
    %v130 = vld [vmem:[#allocation6 + $0x118] sm:$0xf]
    %v131 = vld [vmem:[#allocation6 + $0x11c] sm:$0xf]
    %v132 = vld [vmem:[#allocation6 + $0x120] sm:$0xf]
    %v133 = vld [vmem:[#allocation6 + $0x124] sm:$0xf]
    %v134 = vld [vmem:[#allocation6 + $0x128] sm:$0xf]
    %v135 = vld [vmem:[#allocation6 + $0x12c] sm:$0xf]
    %v136 = vld [vmem:[#allocation6 + $0x130] sm:$0xf]
    %v137 = vld [vmem:[#allocation6 + $0x134] sm:$0xf]
    %v138 = vld [vmem:[#allocation6 + $0x138] sm:$0xf]
    %v139 = vld [vmem:[#allocation6 + $0x13c] sm:$0xf]
    %v140 = vld [vmem:[#allocation6 + $0x140] sm:$0xf]
    %v141 = vld [vmem:[#allocation6 + $0x144] sm:$0xf]
    %v142 = vld [vmem:[#allocation6 + $0x148] sm:$0xf]
    %v143 = vld [vmem:[#allocation6 + $0x14c] sm:$0xf]
    %v144 = vld [vmem:[#allocation6 + $0x150] sm:$0xf]
    %v145 = vld [vmem:[#allocation6 + $0x154] sm:$0xf]
    %v146 = vld [vmem:[#allocation6 + $0x158] sm:$0xf]
    %v147 = vld [vmem:[#allocation6 + $0x15c] sm:$0xf]
    %v148 = vld [vmem:[#allocation6 + $0x160] sm:$0xf]
    %v149 = vld [vmem:[#allocation6 + $0x164] sm:$0xf]
    %v150 = vld [vmem:[#allocation6 + $0x168] sm:$0xf]
    %v151 = vld [vmem:[#allocation6 + $0x16c] sm:$0xf]
    %v152 = vld [vmem:[#allocation6 + $0x170] sm:$0xf]
    %v153 = vld [vmem:[#allocation6 + $0x174] sm:$0xf]
    %v154 = vld [vmem:[#allocation6 + $0x178] sm:$0xf]
    %v155 = vld [vmem:[#allocation6 + $0x17c] sm:$0xf]
    %v252 = vunpack.c.l.b16 %v60
    %v253 = vunpack.c.l.b16 %v61
    %v254 = vunpack.c.l.b16 %v62
    %v255 = vunpack.c.l.b16 %v63
    %v256 = vunpack.c.l.b16 %v64
    %v257 = vunpack.c.l.b16 %v65
    %v258 = vunpack.c.l.b16 %v66
    %v259 = vunpack.c.l.b16 %v67
    %v260 = vunpack.c.l.b16 %v68
    %v261 = vunpack.c.l.b16 %v69
    %v262 = vunpack.c.l.b16 %v70
    %v263 = vunpack.c.l.b16 %v71
    %v264 = vunpack.c.l.b16 %v72
    %v265 = vunpack.c.l.b16 %v73
    %v266 = vunpack.c.l.b16 %v74
    %v267 = vunpack.c.l.b16 %v75
    %v268 = vunpack.c.l.b16 %v76
    %v269 = vunpack.c.l.b16 %v77
    %v270 = vunpack.c.l.b16 %v78
    %v271 = vunpack.c.l.b16 %v79
    %v272 = vunpack.c.l.b16 %v80
    %v273 = vunpack.c.l.b16 %v81
    %v274 = vunpack.c.l.b16 %v82
    %v275 = vunpack.c.l.b16 %v83
    %v276 = vunpack.c.l.b16 %v84
    %v277 = vunpack.c.l.b16 %v85
    %v278 = vunpack.c.l.b16 %v86
    %v279 = vunpack.c.l.b16 %v87
    %v280 = vunpack.c.l.b16 %v88
    %v281 = vunpack.c.l.b16 %v89
    %v282 = vunpack.c.l.b16 %v90
    %v283 = vunpack.c.l.b16 %v91
    %v284 = vunpack.c.l.b16 %v92
    %v285 = vunpack.c.l.b16 %v93
    %v286 = vunpack.c.l.b16 %v94
    %v287 = vunpack.c.l.b16 %v95
    %v288 = vunpack.c.l.b16 %v96
    %v289 = vunpack.c.l.b16 %v97
    %v290 = vunpack.c.l.b16 %v98
    %v291 = vunpack.c.l.b16 %v99
    %v292 = vunpack.c.l.b16 %v100
    %v293 = vunpack.c.l.b16 %v101
    %v294 = vunpack.c.l.b16 %v102
    %v295 = vunpack.c.l.b16 %v103
    %v296 = vunpack.c.l.b16 %v104
    %v297 = vunpack.c.l.b16 %v105
    %v298 = vunpack.c.l.b16 %v106
    %v299 = vunpack.c.l.b16 %v107
    %v300 = vunpack.c.l.b16 %v108
    %v301 = vunpack.c.l.b16 %v109
    %v302 = vunpack.c.l.b16 %v110
    %v303 = vunpack.c.l.b16 %v111
    %v304 = vunpack.c.l.b16 %v112
    %v305 = vunpack.c.l.b16 %v113
    %v306 = vunpack.c.l.b16 %v114
    %v307 = vunpack.c.l.b16 %v115
    %v308 = vunpack.c.l.b16 %v116
    %v309 = vunpack.c.l.b16 %v117
    %v310 = vunpack.c.l.b16 %v118
    %v311 = vunpack.c.l.b16 %v119
    %v312 = vunpack.c.l.b16 %v120
    %v313 = vunpack.c.l.b16 %v121
    %v314 = vunpack.c.l.b16 %v122
    %v315 = vunpack.c.l.b16 %v123
    %v316 = vunpack.c.l.b16 %v124
    %v317 = vunpack.c.l.b16 %v125
    %v318 = vunpack.c.l.b16 %v126
    %v319 = vunpack.c.l.b16 %v127
    %v320 = vunpack.c.l.b16 %v128
    %v321 = vunpack.c.l.b16 %v129
    %v322 = vunpack.c.l.b16 %v130
    %v323 = vunpack.c.l.b16 %v131
    %v324 = vunpack.c.l.b16 %v132
    %v325 = vunpack.c.l.b16 %v133
    %v326 = vunpack.c.l.b16 %v134
    %v327 = vunpack.c.l.b16 %v135
    %v328 = vunpack.c.l.b16 %v136
    %v329 = vunpack.c.l.b16 %v137
    %v330 = vunpack.c.l.b16 %v138
    %v331 = vunpack.c.l.b16 %v139
    %v332 = vunpack.c.l.b16 %v140
    %v333 = vunpack.c.l.b16 %v141
    %v334 = vunpack.c.l.b16 %v142
    %v335 = vunpack.c.l.b16 %v143
    %v336 = vunpack.c.l.b16 %v144
    %v337 = vunpack.c.l.b16 %v145
    %v338 = vunpack.c.l.b16 %v146
    %v339 = vunpack.c.l.b16 %v147
    %v340 = vunpack.c.l.b16 %v148
    %v341 = vunpack.c.l.b16 %v149
    %v342 = vunpack.c.l.b16 %v150
    %v343 = vunpack.c.l.b16 %v151
    %v344 = vunpack.c.l.b16 %v152
    %v345 = vunpack.c.l.b16 %v153
    %v346 = vunpack.c.l.b16 %v154
    %v347 = vunpack.c.l.b16 %v155
    %v348 = vpack.c.b16 %v253, %v252
    %v349 = vpack.c.b16 %v255, %v254
    %v350 = vpack.c.b16 %v257, %v256
    %v351 = vpack.c.b16 %v259, %v258
    %v352 = vpack.c.b16 %v261, %v260
    %v353 = vpack.c.b16 %v263, %v262
    %v354 = vpack.c.b16 %v265, %v264
    %v355 = vpack.c.b16 %v267, %v266
    %v356 = vpack.c.b16 %v269, %v268
    %v357 = vpack.c.b16 %v271, %v270
    %v358 = vpack.c.b16 %v273, %v272
    %v359 = vpack.c.b16 %v275, %v274
    %v360 = vpack.c.b16 %v277, %v276
    %v361 = vpack.c.b16 %v279, %v278
    %v362 = vpack.c.b16 %v281, %v280
    %v363 = vpack.c.b16 %v283, %v282
    %v364 = vpack.c.b16 %v285, %v284
    %v365 = vpack.c.b16 %v287, %v286
    %v366 = vpack.c.b16 %v289, %v288
    %v367 = vpack.c.b16 %v291, %v290
    %v368 = vpack.c.b16 %v293, %v292
    %v369 = vpack.c.b16 %v295, %v294
    %v370 = vpack.c.b16 %v297, %v296
    %v371 = vpack.c.b16 %v299, %v298
    %v372 = vpack.c.b16 %v301, %v300
    %v373 = vpack.c.b16 %v303, %v302
    %v374 = vpack.c.b16 %v305, %v304
    %v375 = vpack.c.b16 %v307, %v306
    %v376 = vpack.c.b16 %v309, %v308
    %v377 = vpack.c.b16 %v311, %v310
    %v378 = vpack.c.b16 %v313, %v312
    %v379 = vpack.c.b16 %v315, %v314
    %v380 = vpack.c.b16 %v317, %v316
    %v381 = vpack.c.b16 %v319, %v318
    %v382 = vpack.c.b16 %v321, %v320
    %v383 = vpack.c.b16 %v323, %v322
    %v384 = vpack.c.b16 %v325, %v324
    %v385 = vpack.c.b16 %v327, %v326
    %v386 = vpack.c.b16 %v329, %v328
    %v387 = vpack.c.b16 %v331, %v330
    %v388 = vpack.c.b16 %v333, %v332
    %v389 = vpack.c.b16 %v335, %v334
    %v390 = vpack.c.b16 %v337, %v336
    %v391 = vpack.c.b16 %v339, %v338
    %v392 = vpack.c.b16 %v341, %v340
    %v393 = vpack.c.b16 %v343, %v342
    %v394 = vpack.c.b16 %v345, %v344
    %v395 = vpack.c.b16 %v347, %v346
    %444 = vmatprep.subr.bf16.mxu0 0
    %445 = vmatpush1.bf16.xpose.msra.mxu0 %v348
    %446 = vmatprep.subr.bf16.mxu0 0
    %447 = vmatpush1.bf16.xpose.msra.mxu0 %v349
    %448 = vmatprep.subr.bf16.mxu0 0
    %449 = vmatpush1.bf16.xpose.msra.mxu0 %v350
    %450 = vmatprep.subr.bf16.mxu0 0
    %451 = vmatpush1.bf16.xpose.msra.mxu0 %v351
    %452 = vmatprep.subr.bf16.mxu0 0
    %453 = vmatpush1.bf16.xpose.msra.mxu0 %v352
    %454 = vmatprep.subr.bf16.mxu0 0
    %455 = vmatpush1.bf16.xpose.msra.mxu0 %v353
    %456 = vmatprep.subr.bf16.mxu0 0
    %457 = vmatpush1.bf16.xpose.msra.mxu0 %v354
    %458 = vmatprep.subr.bf16.mxu0 0
    %459 = vmatpush1.bf16.xpose.msra.mxu0 %v355
    %460 = vmatprep.subr.bf16.mxu0 0
    %461 = vmatpush1.bf16.xpose.msra.mxu0 %v356
    %462 = vmatprep.subr.bf16.mxu0 0
    %463 = vmatpush1.bf16.xpose.msra.mxu0 %v357
    %464 = vmatprep.subr.bf16.mxu0 0
    %465 = vmatpush1.bf16.xpose.msra.mxu0 %v358
    %466 = vmatprep.subr.bf16.mxu0 0
    %467 = vmatpush1.bf16.xpose.msra.mxu0 %v359
    %468 = vmatprep.subr.bf16.mxu0 0
    %469 = vmatpush1.bf16.xpose.msra.mxu0 %v360
    %470 = vmatprep.subr.bf16.mxu0 0
    %471 = vmatpush1.bf16.xpose.msra.mxu0 %v361
    %472 = vmatprep.subr.bf16.mxu0 0
    %473 = vmatpush1.bf16.xpose.msra.mxu0 %v362
    %474 = vmatprep.subr.bf16.mxu0 0
    %475 = vmatpush1.bf16.xpose.msra.mxu0 %v363
    %476 = vmatprep.mubr.bf16.mxu0 0
    %477 = vmatmul.mubr.bf16.gmra.mrb[0].mxu0 %v59
    %v478 = vpop.f32.mrb[0].mxu0
    %v479 = vadd.f32 0.0, %v478
    %v480 = vpop.f32.mrb[0].mxu0
    %v481 = vadd.f32 0.0, %v480
    %v482 = vpop.f32.mrb[0].mxu0
    %v483 = vadd.f32 0.0, %v482
    %v484 = vpop.f32.mrb[0].mxu0
    %v485 = vadd.f32 0.0, %v484
    %486 = vdwg.mxu0
    %487 = vmatprep.subr.bf16.mxu0 0
    %488 = vmatpush1.bf16.xpose.msra.mxu0 %v364
    %489 = vmatprep.subr.bf16.mxu0 0
    %490 = vmatpush1.bf16.xpose.msra.mxu0 %v365
    %491 = vmatprep.subr.bf16.mxu0 0
    %492 = vmatpush1.bf16.xpose.msra.mxu0 %v366
    %493 = vmatprep.subr.bf16.mxu0 0
    %494 = vmatpush1.bf16.xpose.msra.mxu0 %v367
    %495 = vmatprep.subr.bf16.mxu0 0
    %496 = vmatpush1.bf16.xpose.msra.mxu0 %v368
    %497 = vmatprep.subr.bf16.mxu0 0
    %498 = vmatpush1.bf16.xpose.msra.mxu0 %v369
    %499 = vmatprep.subr.bf16.mxu0 0
    %500 = vmatpush1.bf16.xpose.msra.mxu0 %v370
    %501 = vmatprep.subr.bf16.mxu0 0
    %502 = vmatpush1.bf16.xpose.msra.mxu0 %v371
    %503 = vmatprep.subr.bf16.mxu0 0
    %504 = vmatpush1.bf16.xpose.msra.mxu0 %v372
    %505 = vmatprep.subr.bf16.mxu0 0
    %506 = vmatpush1.bf16.xpose.msra.mxu0 %v373
    %507 = vmatprep.subr.bf16.mxu0 0
    %508 = vmatpush1.bf16.xpose.msra.mxu0 %v374
    %509 = vmatprep.subr.bf16.mxu0 0
    %510 = vmatpush1.bf16.xpose.msra.mxu0 %v375
    %511 = vmatprep.subr.bf16.mxu0 0
    %512 = vmatpush1.bf16.xpose.msra.mxu0 %v376
    %513 = vmatprep.subr.bf16.mxu0 0
    %514 = vmatpush1.bf16.xpose.msra.mxu0 %v377
    %515 = vmatprep.subr.bf16.mxu0 0
    %516 = vmatpush1.bf16.xpose.msra.mxu0 %v378
    %517 = vmatprep.subr.bf16.mxu0 0
    %518 = vmatpush1.bf16.xpose.msra.mxu0 %v379
    %519 = vmatprep.mubr.bf16.mxu0 0
    %520 = vmatmul.mubr.bf16.gmra.mrb[0].mxu0 %v59
    %v521 = vpop.f32.mrb[0].mxu0
    %v522 = vadd.f32 0.0, %v521
    %v523 = vpop.f32.mrb[0].mxu0
    %v524 = vadd.f32 0.0, %v523
    %v525 = vpop.f32.mrb[0].mxu0
    %v526 = vadd.f32 0.0, %v525
    %v527 = vpop.f32.mrb[0].mxu0
    %v528 = vadd.f32 0.0, %v527
    %529 = vdwg.mxu0
    %530 = vmatprep.subr.bf16.mxu0 0
    %531 = vmatpush1.bf16.xpose.msra.mxu0 %v380
    %532 = vmatprep.subr.bf16.mxu0 0
    %533 = vmatpush1.bf16.xpose.msra.mxu0 %v381
    %534 = vmatprep.subr.bf16.mxu0 0
    %535 = vmatpush1.bf16.xpose.msra.mxu0 %v382
    %536 = vmatprep.subr.bf16.mxu0 0
    %537 = vmatpush1.bf16.xpose.msra.mxu0 %v383
    %538 = vmatprep.subr.bf16.mxu0 0
    %539 = vmatpush1.bf16.xpose.msra.mxu0 %v384
    %540 = vmatprep.subr.bf16.mxu0 0
    %541 = vmatpush1.bf16.xpose.msra.mxu0 %v385
    %542 = vmatprep.subr.bf16.mxu0 0
    %543 = vmatpush1.bf16.xpose.msra.mxu0 %v386
    %544 = vmatprep.subr.bf16.mxu0 0
    %545 = vmatpush1.bf16.xpose.msra.mxu0 %v387
    %546 = vmatprep.subr.bf16.mxu0 0
    %547 = vmatpush1.bf16.xpose.msra.mxu0 %v388
    %548 = vmatprep.subr.bf16.mxu0 0
    %549 = vmatpush1.bf16.xpose.msra.mxu0 %v389
    %550 = vmatprep.subr.bf16.mxu0 0
    %551 = vmatpush1.bf16.xpose.msra.mxu0 %v390
    %552 = vmatprep.subr.bf16.mxu0 0
    %553 = vmatpush1.bf16.xpose.msra.mxu0 %v391
    %554 = vmatprep.subr.bf16.mxu0 0
    %555 = vmatpush1.bf16.xpose.msra.mxu0 %v392
    %556 = vmatprep.subr.bf16.mxu0 0
    %557 = vmatpush1.bf16.xpose.msra.mxu0 %v393
    %558 = vmatprep.subr.bf16.mxu0 0
    %559 = vmatpush1.bf16.xpose.msra.mxu0 %v394
    %560 = vmatprep.subr.bf16.mxu0 0
    %561 = vmatpush1.bf16.xpose.msra.mxu0 %v395
    %562 = vmatprep.mubr.bf16.mxu0 0
    %563 = vmatmul.mubr.bf16.gmra.mrb[0].mxu0 %v59
    %v564 = vpop.f32.mrb[0].mxu0
    %v565 = vadd.f32 0.0, %v564
    %v566 = vpop.f32.mrb[0].mxu0
    %v567 = vadd.f32 0.0, %v566
    %v568 = vpop.f32.mrb[0].mxu0
    %v569 = vadd.f32 0.0, %v568
    %v570 = vpop.f32.mrb[0].mxu0
    %v571 = vadd.f32 0.0, %v570
    %572 = vdwg.mxu0
    %v573 = vxor.u32 %v479, 2147483648
    %v574 = vxor.u32 %v481, 2147483648
    %v575 = vxor.u32 %v522, 2147483648
    %v576 = vxor.u32 %v483, 2147483648
    %v577 = vxor.u32 %v485, 2147483648
    %v578 = vxor.u32 %v526, 2147483648
    %v579 = vmul.f32 %v573, 1.442695
    %v580 = vpow.pop %v579
    %v581 = vmul.f32 %v574, 1.442695
    %v582 = vpow.pop %v581
    %v583 = vmul.f32 %v575, 1.442695
    %v584 = vpow.pop %v583
    %v585 = vmul.f32 %v576, 1.442695
    %v586 = vpow.pop %v585
    %v587 = vmul.f32 %v577, 1.442695
    %v588 = vpow.pop %v587
    %v589 = vmul.f32 %v578, 1.442695
    %v590 = vpow.pop %v589
    %v591 = vadd.f32 %v580, 1.0
    %v592 = vadd.f32 %v582, 1.0
    %v593 = vadd.f32 %v584, 1.0
    %v594 = vadd.f32 %v586, 1.0
    %v595 = vadd.f32 %v588, 1.0
    %v596 = vadd.f32 %v590, 1.0
    %v597 = vrcp.pop %v591
    %v598 = vmul.f32 1.0, %v597
    %v599 = vrcp.pop %v592
    %v600 = vmul.f32 1.0, %v599
    %v601 = vrcp.pop %v593
    %v602 = vmul.f32 1.0, %v601
    %v603 = vrcp.pop %v594
    %v604 = vmul.f32 1.0, %v603
    %v605 = vrcp.pop %v595
    %v606 = vmul.f32 1.0, %v605
    %v607 = vrcp.pop %v596
    %v608 = vmul.f32 1.0, %v607
    %v609 = vmul.f32 %v479, %v598
    %v610 = vmul.f32 %v481, %v600
    %v611 = vmul.f32 %v522, %v602
    %v612 = vmul.f32 %v483, %v604
    %v613 = vmul.f32 %v485, %v606
    %v614 = vmul.f32 %v526, %v608
    %v615 = vmul.f32 %v609, %v524
    %v616 = vmul.f32 %v610, %v565
    %v617 = vmul.f32 %v611, %v567
    %v618 = vmul.f32 %v612, %v528
    %v619 = vmul.f32 %v613, %v569
    %v620 = vmul.f32 %v614, %v571
    %v621 = vpack.c.bf16 %v618, %v615
    %v622 = vpack.c.bf16 %v619, %v616
    %v623 = vpack.c.bf16 %v620, %v617
    %v624 = vld [vmem:[#allocation8] sm:$0xff]
    %v625 = vld [vmem:[#allocation8 + $0x8] sm:$0xf]
    %v626 = vld [vmem:[#allocation8 + $0xc] sm:$0xff]
    %v627 = vld [vmem:[#allocation8 + $0x14] sm:$0xf]
    %v628 = vld [vmem:[#allocation8 + $0x18] sm:$0xff]
    %v629 = vld [vmem:[#allocation8 + $0x20] sm:$0xf]
    %v630 = vld [vmem:[#allocation8 + $0x24] sm:$0xff]
    %v631 = vld [vmem:[#allocation8 + $0x2c] sm:$0xf]
    %v632 = vld [vmem:[#allocation8 + $0x30] sm:$0xff]
    %v633 = vld [vmem:[#allocation8 + $0x38] sm:$0xf]
    %v634 = vld [vmem:[#allocation8 + $0x3c] sm:$0xff]
    %v635 = vld [vmem:[#allocation8 + $0x44] sm:$0xf]
    %v636 = vld [vmem:[#allocation8 + $0x48] sm:$0xff]
    %v637 = vld [vmem:[#allocation8 + $0x50] sm:$0xf]
    %v638 = vld [vmem:[#allocation8 + $0x54] sm:$0xff]
    %v639 = vld [vmem:[#allocation8 + $0x5c] sm:$0xf]
    %v640 = vld [vmem:[#allocation8 + $0x60] sm:$0xff]
    %v641 = vld [vmem:[#allocation8 + $0x68] sm:$0xf]
    %v642 = vld [vmem:[#allocation8 + $0x6c] sm:$0xff]
    %v643 = vld [vmem:[#allocation8 + $0x74] sm:$0xf]
    %v644 = vld [vmem:[#allocation8 + $0x78] sm:$0xff]
    %v645 = vld [vmem:[#allocation8 + $0x80] sm:$0xf]
    %v646 = vld [vmem:[#allocation8 + $0x84] sm:$0xff]
    %v647 = vld [vmem:[#allocation8 + $0x8c] sm:$0xf]
    %v648 = vld [vmem:[#allocation8 + $0x90] sm:$0xff]
    %v649 = vld [vmem:[#allocation8 + $0x98] sm:$0xf]
    %v650 = vld [vmem:[#allocation8 + $0x9c] sm:$0xff]
    %v651 = vld [vmem:[#allocation8 + $0xa4] sm:$0xf]
    %v652 = vld [vmem:[#allocation8 + $0xa8] sm:$0xff]
    %v653 = vld [vmem:[#allocation8 + $0xb0] sm:$0xf]
    %v654 = vld [vmem:[#allocation8 + $0xb4] sm:$0xff]
    %v655 = vld [vmem:[#allocation8 + $0xbc] sm:$0xf]
    %v688 = vunpack.c.l.b16 %v624
    %v689 = vunpack.c.h.b16 %v624
    %v690 = vunpack.c.l.b16 %v625
    %v691 = vunpack.c.l.b16 %v626
    %v692 = vunpack.c.h.b16 %v626
    %v693 = vunpack.c.l.b16 %v627
    %v694 = vunpack.c.l.b16 %v628
    %v695 = vunpack.c.h.b16 %v628
    %v696 = vunpack.c.l.b16 %v629
    %v697 = vunpack.c.l.b16 %v630
    %v698 = vunpack.c.h.b16 %v630
    %v699 = vunpack.c.l.b16 %v631
    %v700 = vunpack.c.l.b16 %v632
    %v701 = vunpack.c.h.b16 %v632
    %v702 = vunpack.c.l.b16 %v633
    %v703 = vunpack.c.l.b16 %v634
    %v704 = vunpack.c.h.b16 %v634
    %v705 = vunpack.c.l.b16 %v635
    %v706 = vunpack.c.l.b16 %v636
    %v707 = vunpack.c.h.b16 %v636
    %v708 = vunpack.c.l.b16 %v637
    %v709 = vunpack.c.l.b16 %v638
    %v710 = vunpack.c.h.b16 %v638
    %v711 = vunpack.c.l.b16 %v639
    %v712 = vunpack.c.l.b16 %v640
    %v713 = vunpack.c.h.b16 %v640
    %v714 = vunpack.c.l.b16 %v641
    %v715 = vunpack.c.l.b16 %v642
    %v716 = vunpack.c.h.b16 %v642
    %v717 = vunpack.c.l.b16 %v643
    %v718 = vunpack.c.l.b16 %v644
    %v719 = vunpack.c.h.b16 %v644
    %v720 = vunpack.c.l.b16 %v645
    %v721 = vunpack.c.l.b16 %v646
    %v722 = vunpack.c.h.b16 %v646
    %v723 = vunpack.c.l.b16 %v647
    %v724 = vunpack.c.l.b16 %v648
    %v725 = vunpack.c.h.b16 %v648
    %v726 = vunpack.c.l.b16 %v649
    %v727 = vunpack.c.l.b16 %v650
    %v728 = vunpack.c.h.b16 %v650
    %v729 = vunpack.c.l.b16 %v651
    %v730 = vunpack.c.l.b16 %v652
    %v731 = vunpack.c.h.b16 %v652
    %v732 = vunpack.c.l.b16 %v653
    %v733 = vunpack.c.l.b16 %v654
    %v734 = vunpack.c.h.b16 %v654
    %v735 = vunpack.c.l.b16 %v655
    %v736 = vpack.c.b16 %v691, %v688
    %v737 = vpack.c.b16 %v692, %v689
    %v738 = vpack.c.b16 %v693, %v690
    %v739 = vpack.c.b16 %v697, %v694
    %v740 = vpack.c.b16 %v698, %v695
    %v741 = vpack.c.b16 %v699, %v696
    %v742 = vpack.c.b16 %v703, %v700
    %v743 = vpack.c.b16 %v704, %v701
    %v744 = vpack.c.b16 %v705, %v702
    %v745 = vpack.c.b16 %v709, %v706
    %v746 = vpack.c.b16 %v710, %v707
    %v747 = vpack.c.b16 %v711, %v708
    %v748 = vpack.c.b16 %v715, %v712
    %v749 = vpack.c.b16 %v716, %v713
    %v750 = vpack.c.b16 %v717, %v714
    %v751 = vpack.c.b16 %v721, %v718
    %v752 = vpack.c.b16 %v722, %v719
    %v753 = vpack.c.b16 %v723, %v720
    %v754 = vpack.c.b16 %v727, %v724
    %v755 = vpack.c.b16 %v728, %v725
    %v756 = vpack.c.b16 %v729, %v726
    %v757 = vpack.c.b16 %v733, %v730
    %v758 = vpack.c.b16 %v734, %v731
    %v759 = vpack.c.b16 %v735, %v732
    %784 = vmatprep.subr.bf16.mxu0 %v737
    %785 = vmatpush1.bf16.xpose.msra.mxu0 %v736
    %786 = vmatprep.subr.bf16.mxu0 %v740
    %787 = vmatpush1.bf16.xpose.msra.mxu0 %v739
    %788 = vmatprep.subr.bf16.mxu0 %v743
    %789 = vmatpush1.bf16.xpose.msra.mxu0 %v742
    %790 = vmatprep.subr.bf16.mxu0 %v746
    %791 = vmatpush1.bf16.xpose.msra.mxu0 %v745
    %792 = vmatprep.subr.bf16.mxu0 %v749
    %793 = vmatpush1.bf16.xpose.msra.mxu0 %v748
    %794 = vmatprep.subr.bf16.mxu0 %v752
    %795 = vmatpush1.bf16.xpose.msra.mxu0 %v751
    %796 = vmatprep.subr.bf16.mxu0 %v755
    %797 = vmatpush1.bf16.xpose.msra.mxu0 %v754
    %798 = vmatprep.subr.bf16.mxu0 %v758
    %799 = vmatpush1.bf16.xpose.msra.mxu0 %v757
    %800 = vmatprep.subr.bf16.mxu0 0
    %801 = vmatpush1.bf16.xpose.msra.mxu0 0
    %802 = vmatprep.subr.bf16.mxu0 0
    %803 = vmatpush1.bf16.xpose.msra.mxu0 0
    %804 = vmatprep.subr.bf16.mxu0 0
    %805 = vmatpush1.bf16.xpose.msra.mxu0 0
    %806 = vmatprep.subr.bf16.mxu0 0
    %807 = vmatpush1.bf16.xpose.msra.mxu0 0
    %808 = vmatprep.subr.bf16.mxu0 0
    %809 = vmatpush1.bf16.xpose.msra.mxu0 0
    %810 = vmatprep.subr.bf16.mxu0 0
    %811 = vmatpush1.bf16.xpose.msra.mxu0 0
    %812 = vmatprep.subr.bf16.mxu0 0
    %813 = vmatpush1.bf16.xpose.msra.mxu0 0
    %814 = vmatprep.subr.bf16.mxu0 0
    %815 = vmatpush1.bf16.xpose.msra.mxu0 0
    %816 = vmatprep.mubr.bf16.mxu0 %v622
    %817 = vmatmul.mubr.bf16.gmra.mrb[0].mxu0 %v621
    %v818 = vpop.f32.mrb[0].mxu0
    %v819 = vadd.f32 0.0, %v818
    %v820 = vpop.f32.mrb[0].mxu0
    %v821 = vpop.f32.mrb[0].mxu0
    %v822 = vadd.f32 0.0, %v821
    %v823 = vpop.f32.mrb[0].mxu0
    %824 = vdwg.mxu0
    %825 = vmatprep.subr.bf16.mxu0 0
    %826 = vmatpush1.bf16.xpose.msra.mxu0 %v738
    %827 = vmatprep.subr.bf16.mxu0 0
    %828 = vmatpush1.bf16.xpose.msra.mxu0 %v741
    %829 = vmatprep.subr.bf16.mxu0 0
    %830 = vmatpush1.bf16.xpose.msra.mxu0 %v744
    %831 = vmatprep.subr.bf16.mxu0 0
    %832 = vmatpush1.bf16.xpose.msra.mxu0 %v747
    %833 = vmatprep.subr.bf16.mxu0 0
    %834 = vmatpush1.bf16.xpose.msra.mxu0 %v750
    %835 = vmatprep.subr.bf16.mxu0 0
    %836 = vmatpush1.bf16.xpose.msra.mxu0 %v753
    %837 = vmatprep.subr.bf16.mxu0 0
    %838 = vmatpush1.bf16.xpose.msra.mxu0 %v756
    %839 = vmatprep.subr.bf16.mxu0 0
    %840 = vmatpush1.bf16.xpose.msra.mxu0 %v759
    %841 = vmatprep.subr.bf16.mxu0 0
    %842 = vmatpush1.bf16.xpose.msra.mxu0 0
    %843 = vmatprep.subr.bf16.mxu0 0
    %844 = vmatpush1.bf16.xpose.msra.mxu0 0
    %845 = vmatprep.subr.bf16.mxu0 0
    %846 = vmatpush1.bf16.xpose.msra.mxu0 0
    %847 = vmatprep.subr.bf16.mxu0 0
    %848 = vmatpush1.bf16.xpose.msra.mxu0 0
    %849 = vmatprep.subr.bf16.mxu0 0
    %850 = vmatpush1.bf16.xpose.msra.mxu0 0
    %851 = vmatprep.subr.bf16.mxu0 0
    %852 = vmatpush1.bf16.xpose.msra.mxu0 0
    %853 = vmatprep.subr.bf16.mxu0 0
    %854 = vmatpush1.bf16.xpose.msra.mxu0 0
    %855 = vmatprep.subr.bf16.mxu0 0
    %856 = vmatpush1.bf16.xpose.msra.mxu0 0
    %857 = vmatprep.mubr.bf16.mxu0 0
    %858 = vmatmul.mubr.bf16.gmra.mrb[0].mxu0 %v623
    %v859 = vpop.f32.mrb[0].mxu0
    %v860 = vadd.f32 %v819, %v859
    %v861 = vpop.f32.mrb[0].mxu0
    %v862 = vpop.f32.mrb[0].mxu0
    %v863 = vadd.f32 %v822, %v862
    %v864 = vpop.f32.mrb[0].mxu0
    %865 = vdwg.mxu0
    %p866 = scmp.eq.s32.totalorder 0, 0
    // Predicated region
    $region26: #{tpu_custom_call.1} parent=1 // pred_check
      %p867 = pneg %p866
    $region27: #{tpu_custom_call.1} parent=1 // pred_check_branch
      %869 = sbr.rel (%p867) target = $region29
    $region28: #{tpu_custom_call.1} parent=1 // pred_region
      %870 = vst [vmem:[#allocation2] sm:$0xff] %v860
      %871 = vst [vmem:[#allocation2 + $0x8] sm:$0xff] %v863
    $region29: #{tpu_custom_call.1} parent=1 // pred_fallthru
      _
    %p872 = scmp.gt.s32.totalorder 0, 0
    // Predicated region
    $region30: #{tpu_custom_call.1} parent=1 // pred_check
      %p873 = pneg %p872
    $region31: #{tpu_custom_call.1} parent=1 // pred_check_branch
      %875 = sbr.rel (%p873) target = $region33
    $region32: #{tpu_custom_call.1} parent=1 // pred_region
      %v876 = vld [vmem:[#allocation2] sm:$0xff]
      %v877 = vld [vmem:[#allocation2 + $0x8] sm:$0xff]
      %v878 = vadd.f32 %v876, %v860
      %v879 = vadd.f32 %v877, %v863
      %880 = vst [vmem:[#allocation2] sm:$0xff] %v878
      %881 = vst [vmem:[#allocation2 + $0x8] sm:$0xff] %v879
    $region33: #{tpu_custom_call.1} parent=1 // pred_fallthru
      _
    // Predicated region
    $region34: #{tpu_custom_call.1} parent=1 // pred_check
      %p882 = pneg %p866
    $region35: #{tpu_custom_call.1} parent=1 // pred_check_branch
      %884 = sbr.rel (%p882) target = $region37
    $region36: #{tpu_custom_call.1} parent=1 // pred_region
      %v885 = vld [vmem:[#allocation2] sm:$0xff]
      %v886 = vld [vmem:[#allocation2 + $0x8] sm:$0xff]
      %887 = vst [vmem:[#allocation9] sm:$0xff] %v885
      %888 = vst [vmem:[#allocation9 + $0x8] sm:$0xff] %v886
    $region37: #{tpu_custom_call.1} parent=1 // pred_fallthru
      _
    // Predicated region
    $region38: #{tpu_custom_call.1} parent=1 // pred_check
      _
    $region39: #{tpu_custom_call.1} parent=1 // pred_check_branch
      %890 = sbr.rel (0) target = $region41
    $region40: #{tpu_custom_call.1} parent=1 // pred_region
      %s892 = ssub.s32 256, 256
      %893 = vsyncadd [#allocation5], %s892
      %s894 = sshll.u32 [#allocation9], 4
      %s895 = int_to_ptr.vmem [resolvable:$true] %s894
      %900 = dma.vmem_to_hbm [thread:$0]  %s895, 256, %s3, [#allocation5], 128, 128, 8
    $region41: #{tpu_custom_call.1} parent=1 // pred_fallthru
      _
    // Predicated region
    $region42: #{tpu_custom_call.1} parent=1 // pred_check
      _
    $region43: #{tpu_custom_call.1} parent=1 // pred_check_branch
      %902 = sbr.rel (0) target = $region45
    $region44: #{tpu_custom_call.1} parent=1 // pred_region
      %903 = dma.done [#allocation5], 256
    $region45: #{tpu_custom_call.1} parent=1 // pred_fallthru
      _
    %904 = vsyncpa [#allocation4], 1
    %905 = vsyncpa [#allocation7], 1
    %906 = vsyncpa [#allocation5], 1

</llo_original>
